<compile_context>
chip_gen: v6e
topology: v6e:2x2x1
jax: 0.10.0
libtpu: 0.0.40
codegen_flags: <defaults>
</compile_context>

<pallas_src>
import math

import jax
import jax.numpy as jnp
from jax.experimental import pallas as pl
from jax.experimental.pallas import tpu as pltpu


def _round_up(a, b):
    return ((a + b - 1) // b) * b


def _vmem_capacity_bytes():
    try:
        cap = int(getattr(pltpu.get_tpu_info(), "vmem_capacity_bytes"))
        if cap > 0:
            return cap
    except Exception:
        pass
    return 128 * 1024 * 1024


def _proj_lsm_singletile_kernel(x_ref, w_ref, b_ref, o_ref):
    # Whole (padded) vocab in one tile -> exact log_softmax in a single pass.
    logits = jnp.dot(x_ref[...], w_ref[...],
                     preferred_element_type=jnp.float32) + b_ref[...]
    m = jnp.max(logits, axis=-1, keepdims=True)
    lse = m + jnp.log(jnp.sum(jnp.exp(logits - m), axis=-1, keepdims=True))
    o_ref[...] = (logits - lse).astype(o_ref.dtype)


def _proj_lsm_multitile_kernel(x_ref, w_ref, b_ref, o_ref, m_ref, l_ref):
    # x_ref: (tm, d_model), w_ref: (d_model, tn), b_ref: (1, tn)
    # o_ref: (tm, tn), m_ref / l_ref: (tm, 1) f32 running max / running sum-exp.
    p = pl.program_id(1)   # 0 = LSE accumulation pass, 1 = output write pass
    j = pl.program_id(2)   # vocab tile index

    logits = jnp.dot(x_ref[...], w_ref[...],
                     preferred_element_type=jnp.float32) + b_ref[...]

    @pl.when(jnp.logical_and(p == 0, j == 0))
    def _():
        m_ref[...] = jnp.full_like(m_ref, -jnp.inf)
        l_ref[...] = jnp.zeros_like(l_ref)

    @pl.when(p == 0)
    def _():
        m_prev = m_ref[...]
        m_new = jnp.maximum(m_prev, jnp.max(logits, axis=-1, keepdims=True))
        l_ref[...] = (l_ref[...] * jnp.exp(m_prev - m_new)
                      + jnp.sum(jnp.exp(logits - m_new), axis=-1, keepdims=True))
        m_ref[...] = m_new

    @pl.when(p == 1)
    def _():
        lse = m_ref[...] + jnp.log(l_ref[...])
        o_ref[...] = (logits - lse).astype(o_ref.dtype)


class ProjectionLayer:
    """log_softmax(x @ W^T + b, axis=-1) with nn.Linear-style parameters.

    weight: (vocab, d_model) -- transposed + vocab-padded ONCE here (init time);
    bias:   (vocab,).  The forward path only pads rows of x (cheap).
    """

    def __init__(self, weight, bias, *, tm=None, tn=None, out_dtype=None):
        weight = jnp.asarray(weight)
        bias = jnp.asarray(bias)
        vocab, d_model = weight.shape
        self.d_model = int(d_model)
        self.vocab = int(vocab)
        self.out_dtype = out_dtype

        self.vmem_cap = _vmem_capacity_bytes()
        self._vmem_budget = int(0.85 * self.vmem_cap)
        big_vmem = self.vmem_cap >= 100 * 1024 * 1024   # v5e/v6e: 128 MiB; v7x: 64 MiB

        w_sz = jnp.dtype(weight.dtype).itemsize

        # ---- vocab tile (fixed at init so vocab padding happens exactly once) ----
        if tn is None:
            tn = 1024                                    # multiple of 256; lane-dense stores
        tn = max(128, min(_round_up(tn, 128), _round_up(self.vocab, 256)))
        # keep the double-buffered (d_model, tn) weight tile within ~40% of the budget
        while tn > 128 and 2 * self.d_model * tn * w_sz > 0.4 * self._vmem_budget:
            tn -= 128
        self.tn = tn
        self.v_pad = _round_up(self.vocab, tn)
        # Padded vocab columns use weight=0 / bias=-1e30 so exp() underflows to 0.
        # Only safe while the padding never fills an entire vocab tile (the running
        # max of every tile must come from a real column).
        assert self.v_pad - self.vocab < tn, "vocab padding must not fill a full tile"

        # ---- requested row tile (clamped per call to the actual M) ----
        if tm is None:
            tm = 1024 if big_vmem else 512
        self.tm_req = max(8, _round_up(tm, 8))

        # ---- one-time parameter prep: transpose + pad OUT of the forward path ----
        w_t = weight.T                                   # (d_model, vocab)
        b = bias.astype(jnp.float32)
        if self.v_pad != self.vocab:
            w_t = jnp.pad(w_t, ((0, 0), (0, self.v_pad - self.vocab)))
            b = jnp.pad(b, (0, self.v_pad - self.vocab), constant_values=-1e30)
        self.w_t = w_t
        self.b = b.reshape(1, self.v_pad)

    def __call__(self, x):
        B, S, d_model = x.shape
        assert d_model == self.d_model, "input feature dim mismatch"
        M = B * S
        out_dtype = self.out_dtype if self.out_dtype is not None else x.dtype
        d = self.d_model
        tn = self.tn
        v_pad = self.v_pad

        w_sz = jnp.dtype(self.w_t.dtype).itemsize
        o_sz = jnp.dtype(out_dtype).itemsize

        # Row tile: clamp to the problem, then keep >= 2 row tiles when possible so
        # the "parallel" row axis can feed both TensorCores (v7x megacore).
        tm = min(self.tm_req, _round_up(M, 8))
        if M >= 16 and _round_up(M, tm) == tm:
            tm = _round_up((M + 1) // 2, 8)

        def vmem_est(tm_):
            return (2 * tm_ * d * w_sz           # x row tile (cast to weight dtype)
                    + 2 * d * tn * w_sz          # weight tile (streamed or resident)
                    + 2 * 8 * tn * 4             # bias tile (sublane-padded f32)
                    + 2 * tm_ * tn * o_sz        # output tile
                    + 2 * tm_ * 128 * 4          # m / l scratch (lane-padded)
                    + 3 * tm_ * tn * 4)          # f32 logits + exp temporaries

        while tm > 8 and vmem_est(tm) > self._vmem_budget:
            tm = max(8, _round_up(tm // 2, 8))

        m_pad = _round_up(M, tm)
        vmem_limit = int(min(self._vmem_budget,
                             max(vmem_est(tm) + (8 << 20), 32 << 20)))

        x2 = x.reshape(M, d)
        if x2.dtype != self.w_t.dtype:
            x2 = x2.astype(self.w_t.dtype)       # bf16 weights -> bf16 MXU matmul
        if m_pad != M:
            x2 = jnp.pad(x2, ((0, m_pad - M), (0, 0)))

        if v_pad == tn:
            # ---------- single-pass fast path: whole vocab fits one tile ----------
            out = pl.pallas_call(
                _proj_lsm_singletile_kernel,
                out_shape=jax.ShapeDtypeStruct((m_pad, v_pad), out_dtype),
                grid_spec=pltpu.PrefetchScalarGridSpec(
                    num_scalar_prefetch=0,
                    grid=(m_pad // tm,),
                    in_specs=[
                        pl.BlockSpec((tm, d), lambda i: (i, 0)),       # row tile
                        pl.BlockSpec((d, v_pad), lambda i: (0, 0)),    # resident weight
                        pl.BlockSpec((1, v_pad), lambda i: (0, 0)),    # resident bias
                    ],
                    out_specs=pl.BlockSpec((tm, v_pad), lambda i: (i, 0)),
                ),
                compiler_params=pltpu.CompilerParams(
                    dimension_semantics=("parallel",),
                    vmem_limit_bytes=vmem_limit),
            )(x2, self.w_t, self.b)
        else:
            # ---------- two-pass online-LSE path for tiled vocab ----------
            grid = (m_pad // tm, 2, v_pad // tn)
            out = pl.pallas_call(
                _proj_lsm_multitile_kernel,
                out_shape=jax.ShapeDtypeStruct((m_pad, v_pad), out_dtype),
                grid_spec=pltpu.PrefetchScalarGridSpec(
                    num_scalar_prefetch=0,
                    grid=grid,
                    in_specs=[
                        pl.BlockSpec((tm, d), lambda i, p, j: (i, 0)),   # resident per row tile
                        pl.BlockSpec((d, tn), lambda i, p, j: (0, j)),   # streamed weight tile
                        pl.BlockSpec((1, tn), lambda i, p, j: (0, j)),   # streamed bias tile
                    ],
                    # Pass 0 parks the output window at (i, 0) and never writes it;
                    # pass 1 visits each (i, j) exactly once -> no garbage write-backs.
                    out_specs=pl.BlockSpec((tm, tn), lambda i, p, j: (i, p * j)),
                    scratch_shapes=[pltpu.VMEM((tm, 1), jnp.float32),    # running max
                                    pltpu.VMEM((tm, 1), jnp.float32)],   # running sum-exp
                ),
                compiler_params=pltpu.CompilerParams(
                    dimension_semantics=("parallel", "arbitrary", "arbitrary"),
                    vmem_limit_bytes=vmem_limit),
            )(x2, self.w_t, self.b)

        return out[:M, :self.vocab].reshape(B, S, self.vocab)


def _ref(x, weight, bias):
    logits = jnp.einsum("bsd,vd->bsv", x, weight) + bias
    return jax.nn.log_softmax(logits, axis=-1)


if __name__ == "__main__":
    # Small shapes that still exercise row padding, the single-tile fast path,
    # and the multi-tile two-pass vocab path.
    batch, seq, d_model, vocab = 2, 9, 32, 500

    key = jax.random.PRNGKey(0)
    kx, kw, kb = jax.random.split(key, 3)

    x = jax.random.normal(kx, (batch, seq, d_model), dtype=jnp.float32)

    # Deterministic init mimicking nn.Linear defaults.
    bound = 1.0 / math.sqrt(d_model)
    weight = jax.random.uniform(kw, (vocab, d_model), jnp.float32, -bound, bound)
    bias = jax.random.uniform(kb, (vocab,), jnp.float32, -bound, bound)

    ref = _ref(x, weight, bias)

    # Default config: vocab=500 -> single 512-wide tile -> single-pass fast path.
    layer = ProjectionLayer(weight, bias)
    out = jax.block_until_ready(layer(x))
    assert out.shape == (batch, seq, vocab)
    assert jnp.allclose(out, ref, atol=1e-4, rtol=1e-4), "fast-path mismatch vs reference"

    # Force the tiled-vocab two-pass path (4 vocab tiles of 128) + row tiling/padding.
    layer_tiled = ProjectionLayer(weight, bias, tm=256, tn=128)
    out_tiled = jax.block_until_ready(layer_tiled(x))
    assert out_tiled.shape == (batch, seq, vocab)
    assert jnp.allclose(out_tiled, ref, atol=1e-4, rtol=1e-4), "tiled-path mismatch vs reference"

    # bf16-weight configuration (high-throughput path on v6e/v7x): compile/run +
    # sanity check only, since bf16 numerics are looser by design.
    layer_bf16 = ProjectionLayer(weight.astype(jnp.bfloat16), bias, tn=128)
    out_bf = jax.block_until_ready(layer_bf16(x))
    assert out_bf.shape == (batch, seq, vocab)
    assert bool(jnp.isfinite(out_bf).all())

    print("KERNEL_OK")
</pallas_src>

<mosaic_0001>
module attributes {stable_mosaic.version = 11 : i64} {
  func.func @_proj_lsm_singletile_kernel(%arg0: i32, %arg1: memref<16x32xf32, #tpu.memory_space<vmem>>, %arg2: memref<32x512xf32, #tpu.memory_space<vmem>>, %arg3: memref<1x512xf32, #tpu.memory_space<vmem>>, %arg4: memref<16x512xf32, #tpu.memory_space<vmem>>) attributes {dimension_semantics = [#tpu.dimension_semantics<parallel>], iteration_bounds = array<i64: 2>, scalar_prefetch = 0 : i64, scratch_operands = 0 : i64, tpu.core_type = #tpu.core_type<tc>, window_params = [{transform_indices = @transform_0, window_bounds = array<i64: 16, 32>}, {pipeline_mode = #tpu.pipeline_mode<synchronous>, transform_indices = @transform_1, window_bounds = array<i64: 32, 512>}, {pipeline_mode = #tpu.pipeline_mode<synchronous>, transform_indices = @transform_2, window_bounds = array<i64: 1, 512>}, {transform_indices = @transform_3, window_bounds = array<i64: 16, 512>}]} {
    %c0 = arith.constant 0 : index
    %c0_0 = arith.constant 0 : index
    %0 = vector.load %arg1[%c0, %c0_0] : memref<16x32xf32, #tpu.memory_space<vmem>>, vector<16x32xf32>
    %c0_1 = arith.constant 0 : index
    %c0_2 = arith.constant 0 : index
    %1 = vector.load %arg2[%c0_1, %c0_2] : memref<32x512xf32, #tpu.memory_space<vmem>>, vector<32x512xf32>
    %cst = arith.constant dense<0.000000e+00> : vector<16x512xf32>
    %2 = tpu.matmul %0, %1, %cst {dimension_numbers = #tpu.dot_dimension_numbers<[1], [0], [0], [1], [0, 0, 1, 1], [], []>} : vector<16x32xf32>, vector<32x512xf32>, vector<16x512xf32> -> vector<16x512xf32>
    %c0_3 = arith.constant 0 : index
    %c0_4 = arith.constant 0 : index
    %3 = vector.load %arg3[%c0_3, %c0_4] : memref<1x512xf32, #tpu.memory_space<vmem>>, vector<1x512xf32>
    %4 = vector.broadcast %3 : vector<1x512xf32> to vector<16x512xf32>
    %5 = arith.addf %2, %4 : vector<16x512xf32>
    %cst_5 = arith.constant dense<0xFF800000> : vector<16xf32>
    %6 = vector.multi_reduction <maximumf>, %5, %cst_5 [1] : vector<16x512xf32> to vector<16xf32>
    %7 = vector.shape_cast %6 : vector<16xf32> to vector<16x1xf32>
    %8 = vector.broadcast %7 : vector<16x1xf32> to vector<16x512xf32>
    %9 = arith.subf %5, %8 : vector<16x512xf32>
    %10 = math.exp %9 : vector<16x512xf32>
    %cst_6 = arith.constant dense<0.000000e+00> : vector<16xf32>
    %11 = vector.multi_reduction <add>, %10, %cst_6 [1] : vector<16x512xf32> to vector<16xf32>
    %12 = vector.shape_cast %11 : vector<16xf32> to vector<16x1xf32>
    %13 = math.log %12 : vector<16x1xf32>
    %14 = arith.addf %7, %13 : vector<16x1xf32>
    %15 = vector.broadcast %14 : vector<16x1xf32> to vector<16x512xf32>
    %16 = arith.subf %5, %15 : vector<16x512xf32>
    %c0_7 = arith.constant 0 : index
    %c0_8 = arith.constant 0 : index
    %17 = vector.load %arg4[%c0_7, %c0_8] : memref<16x512xf32, #tpu.memory_space<vmem>>, vector<16x512xf32>
    tpu.vector_store %arg4[%c0_7, %c0_8], %16 {strides = array<i32>} : memref<16x512xf32, #tpu.memory_space<vmem>>, vector<16x512xf32>,
    return
  }
  func.func @transform_0(%arg0: i32) -> (i32, i32) {
    %c0_i32 = arith.constant 0 : i32
    %c0_i32_0 = arith.constant 0 : i32
    return %arg0, %c0_i32 : i32, i32
  }
  func.func @transform_1(%arg0: i32) -> (i32, i32) {
    %c0_i32 = arith.constant 0 : i32
    %c0_i32_0 = arith.constant 0 : i32
    %c0_i32_1 = arith.constant 0 : i32
    return %c0_i32, %c0_i32_0 : i32, i32
  }
  func.func @transform_2(%arg0: i32) -> (i32, i32) {
    %c0_i32 = arith.constant 0 : i32
    %c0_i32_0 = arith.constant 0 : i32
    %c0_i32_1 = arith.constant 0 : i32
    return %c0_i32, %c0_i32_0 : i32, i32
  }
  func.func @transform_3(%arg0: i32) -> (i32, i32) {
    %c0_i32 = arith.constant 0 : i32
    %c0_i32_0 = arith.constant 0 : i32
    return %arg0, %c0_i32 : i32, i32
  }
}

</mosaic_0001>

<llo_original>
// kernel: tpu_custom_call.1
$region0: #{tpu_custom_call.1}
  #allocation0 [shape = 'u32[]', space=smem, size = 0x4, offset = 0x4, fixed_abs, tag = 'smem constant byte address 0x4 - core index']
  #allocation1 [shape = 'u32[144,128]{1,0:T(1,128)}', space=vmem, size = 0x12000, scoped, tag = 'internal scratch']
  %s0 = inlined_call_operand.hbm [shape: f32[32,32], index: 0, kind: input, shape index: {}]
  %s1 = inlined_call_operand.hbm [shape: f32[32,512], index: 1, kind: input, shape index: {}]
  %s2 = inlined_call_operand.hbm [shape: f32[1,512], index: 2, kind: input, shape index: {}]
  %s3 = inlined_call_operand.hbm [shape: f32[32,512], index: 3, kind: output, shape index: {}]
  %s4 = sld [smem:[#allocation0]]
  $region57: #{tpu_custom_call.1} parent=0
    _
  %s6 = ssub.s32 1, %s4
  %s7 = scalar_select 0, %s6, %s4
  $region1: #{tpu_custom_call.1} parent=0
    #allocation2 [shape = 'u8[16384]{0}', space=vmem, size = 0x4000, scoped, tag = 'input window, operand 0']
    #allocation3 [shape = 's32[2]{0}', space=sflag, size = 0x8, scoped, tag = 'scoped memory for tpu_custom_call.1']
    #allocation4 [shape = 's32[2]{0}', space=sflag, size = 0x8, scoped, tag = 'scoped memory for tpu_custom_call.1']
    #allocation5 [shape = 'u8[65536]{0}', space=vmem, size = 0x10000, scoped, tag = 'input window, operand 1, single buffered']
    #allocation6 [shape = 's32[1]{0}', space=sflag, size = 0x4, scoped, tag = 'scoped memory for tpu_custom_call.1']
    #allocation7 [shape = 'u8[2048]{0}', space=vmem, size = 0x800, scoped, tag = 'input window, operand 2, single buffered']
    #allocation8 [shape = 'u8[65536]{0}', space=vmem, size = 0x10000, scoped, tag = 'output window, operand 0']
    %8 = vsyncpa [#allocation3], 0
    %s9 = scalar_lea.sflag [#allocation3], 1
    %10 = vsyncpa %s9, 0
    %11 = vsyncpa [#allocation6], 0
    %12 = vsyncpa [#allocation4], 0
    %s13 = scalar_lea.sflag [#allocation4], 1
    %14 = vsyncpa %s13, 0
    loop: start=0, step=1, limit=4
    $region2: #{tpu_custom_call.1} parent=1 // loop_pre_header
      _
    $region3: #{tpu_custom_call.1} parent=1 // loop_header
      %s16 = sphi 0, %s20
      %p17 = scmp.ge.s32.totalorder %s16, 4
      %s26 = sphi 0, %s28
      %s29 = sphi 0, %s26
      %s30 = sphi 0, %s29
      %s46 = sphi 0, %s30
      %s50 = sphi 0, %s50
      %s52 = sphi 0, %s50
      %s53 = sphi 0, %s52
      %s67 = sphi 0, %s53
      %s71 = sphi 0, %s71
      %s73 = sphi 0, %s71
      %s74 = sphi 0, %s73
      %s88 = sphi 0, %s74
      %s94 = sphi 0, %s96
      %s97 = sphi 0, %s94
      %s98 = sphi 0, %s97
      %s114 = sphi 0, %s98
    $region4: #{tpu_custom_call.1} parent=1 // loop_header_branch
      %19 = sbr.rel (%p17) target = $region8
    $region5: #{tpu_custom_call.1} parent=1 // loop_body
      %s21 = ssub.s32 %s16, 1
      %s22 = ssub.s32 %s16, 2
      %s23 = sadd.s32 %s16, 1
      %s24 = ssub.s32 %s16, %s23
      %p25 = scmp.eq.s32.totalorder %s24, 0
      %s27 = sadd.s32 %s26, 1
      %s28 = scalar_select %p25, %s26, %s27
      %p31 = pneg %p25
      %p32 = scmp.eq.s32.totalorder %s16, 1
      %p33 = por %p31, %p32
      %p34 = scmp.ne.s32.totalorder %s26, %s29
      %p35 = scmp.eq.s32.totalorder %s16, 0
      %p36 = por %p34, %p35
      %p37 = scmp.ne.s32.totalorder %s26, %s29
      %p38 = scmp.eq.s32.totalorder %s21, 1
      %p39 = por %p37, %p38
      %p40 = scmp.ne.s32.totalorder %s29, %s30
      %p41 = scmp.eq.s32.totalorder %s21, 0
      %p42 = por %p40, %p41
      %p43 = scmp.ne.s32.totalorder %s29, %s30
      %p44 = scmp.eq.s32.totalorder %s22, 1
      %p45 = por %p43, %p44
      %p47 = scmp.ne.s32.totalorder %s30, %s46
      %p48 = scmp.eq.s32.totalorder %s22, 0
      %p49 = por %p47, %p48
      %s51 = sadd.s32 %s50, 1
      %p54 = scmp.eq.s32.totalorder %s16, 1
      %p55 = scmp.ne.s32.totalorder %s50, %s52
      %p56 = scmp.eq.s32.totalorder %s16, 0
      %p57 = por %p55, %p56
      %p58 = scmp.ne.s32.totalorder %s50, %s52
      %p59 = scmp.eq.s32.totalorder %s21, 1
      %p60 = por %p58, %p59
      %p61 = scmp.ne.s32.totalorder %s52, %s53
      %p62 = scmp.eq.s32.totalorder %s21, 0
      %p63 = por %p61, %p62
      %p64 = scmp.ne.s32.totalorder %s52, %s53
      %p65 = scmp.eq.s32.totalorder %s22, 1
      %p66 = por %p64, %p65
      %p68 = scmp.ne.s32.totalorder %s53, %s67
      %p69 = scmp.eq.s32.totalorder %s22, 0
      %p70 = por %p68, %p69
      %s72 = sadd.s32 %s71, 1
      %p75 = scmp.eq.s32.totalorder %s16, 1
      %p76 = scmp.ne.s32.totalorder %s71, %s73
      %p77 = scmp.eq.s32.totalorder %s16, 0
      %p78 = por %p76, %p77
      %p79 = scmp.ne.s32.totalorder %s71, %s73
      %p80 = scmp.eq.s32.totalorder %s21, 1
      %p81 = por %p79, %p80
      %p82 = scmp.ne.s32.totalorder %s73, %s74
      %p83 = scmp.eq.s32.totalorder %s21, 0
      %p84 = por %p82, %p83
      %p85 = scmp.ne.s32.totalorder %s73, %s74
      %p86 = scmp.eq.s32.totalorder %s22, 1
      %p87 = por %p85, %p86
      %p89 = scmp.ne.s32.totalorder %s74, %s88
      %p90 = scmp.eq.s32.totalorder %s22, 0
      %p91 = por %p89, %p90
      %s92 = ssub.s32 %s16, %s23
      %p93 = scmp.eq.s32.totalorder %s92, 0
      %s95 = sadd.s32 %s94, 1
      %s96 = scalar_select %p93, %s94, %s95
      %p99 = pneg %p93
      %p100 = scmp.eq.s32.totalorder %s16, 1
      %p101 = por %p99, %p100
      %p102 = scmp.ne.s32.totalorder %s94, %s97
      %p103 = scmp.eq.s32.totalorder %s16, 0
      %p104 = por %p102, %p103
      %p105 = scmp.ne.s32.totalorder %s94, %s97
      %p106 = scmp.eq.s32.totalorder %s21, 1
      %p107 = por %p105, %p106
      %p108 = scmp.ne.s32.totalorder %s97, %s98
      %p109 = scmp.eq.s32.totalorder %s21, 0
      %p110 = por %p108, %p109
      %p111 = scmp.ne.s32.totalorder %s97, %s98
      %p112 = scmp.eq.s32.totalorder %s22, 1
      %p113 = por %p111, %p112
      %p115 = scmp.ne.s32.totalorder %s98, %s114
      %p116 = scmp.eq.s32.totalorder %s22, 0
      %p117 = por %p115, %p116
      %p118 = scmp.le.s32.totalorder 1, %s16
      %p119 = scmp.lt.s32.totalorder %s16, 3
      %p120 = pnand %p118, %p119
      %p121 = pneg %p120
      // Predicated region
      $region9: #{tpu_custom_call.1} parent=5 // pred_check
        _
      $region10: #{tpu_custom_call.1} parent=5 // pred_check_branch
        %123 = sbr.rel (%p120) target = $region12
      $region11: #{tpu_custom_call.1} parent=5 // pred_region
        %s124 = ssub.s32 %s16, 1
        // Predicated region
        $region13: #{tpu_custom_call.1} parent=11 // pred_check
          %p125 = pneg %p63
        $region14: #{tpu_custom_call.1} parent=11 // pred_check_branch
          %127 = sbr.rel (%p125) target = $region16
        $region15: #{tpu_custom_call.1} parent=11 // pred_region
          %s129 = ssub.s32 2048, 2048
          %130 = vsyncadd [#allocation6], %s129
          %s131 = sshll.u32 [#allocation5], 4
          %s132 = int_to_ptr.vmem [resolvable:$true] %s131
          %137 = dma.hbm_to_vmem [thread:$0]  %s1, 2048, %s132, [#allocation6], 512, 512, 32
        $region16: #{tpu_custom_call.1} parent=11 // pred_fallthru
          _
        // Predicated region
        $region17: #{tpu_custom_call.1} parent=11 // pred_check
          %p138 = pneg %p84
        $region18: #{tpu_custom_call.1} parent=11 // pred_check_branch
          %140 = sbr.rel (%p138) target = $region20
        $region19: #{tpu_custom_call.1} parent=11 // pred_region
          %s142 = ssub.s32 64, 64
          %143 = vsyncadd [#allocation6], %s142
          %s145 = sshll.u32 [#allocation7], 4
          %s146 = int_to_ptr.vmem [resolvable:$true] %s145
          %148 = dma.hbm_to_vmem [thread:$0]  %s2, 64, %s146, [#allocation6]
        $region20: #{tpu_custom_call.1} parent=11 // pred_fallthru
          _
      $region12: #{tpu_custom_call.1} parent=5 // pred_fallthru
        _
      %p149 = scmp.lt.s32.totalorder %s16, 2
      // Predicated region
      $region21: #{tpu_custom_call.1} parent=5 // pred_check
        %p150 = pneg %p149
      $region22: #{tpu_custom_call.1} parent=5 // pred_check_branch
        %152 = sbr.rel (%p150) target = $region24
      $region23: #{tpu_custom_call.1} parent=5 // pred_region
        // Predicated region
        $region25: #{tpu_custom_call.1} parent=23 // pred_check
          %p153 = pneg %p36
        $region26: #{tpu_custom_call.1} parent=23 // pred_check_branch
          %155 = sbr.rel (%p153) target = $region28
        $region27: #{tpu_custom_call.1} parent=23 // pred_region
          %s156 = sand.u32 %s26, 1
          %s157 = scalar_lea.sflag [#allocation3], %s156
          %s158 = sand.u32 %s26, 1
          %s159 = smul.addr %s158, 16
          %s160 = scalar_lea.vmem [#allocation2], %s159
          %s161 = smul.u32 2, %s16
          %s163 = ssub.s32 256, 256
          %164 = vsyncadd %s157, %s163
          %s165 = smul.addr %s161, 128
          %s166 = scalar_lea.hbm %s0, %s165
          %s167 = sshll.u32 %s160, 4
          %s168 = int_to_ptr.vmem [resolvable:$true] %s167
          %173 = dma.hbm_to_vmem [thread:$0]  %s166, 256, %s168, %s157, 128, 128, 8
        $region28: #{tpu_custom_call.1} parent=23 // pred_fallthru
          _
      $region24: #{tpu_custom_call.1} parent=5 // pred_fallthru
        _
      %p174 = scmp.le.s32.totalorder 1, %s16
      %p175 = scmp.lt.s32.totalorder %s16, 3
      %p176 = pnand %p174, %p175
      %p177 = pneg %p176
      // Predicated region
      $region29: #{tpu_custom_call.1} parent=5 // pred_check
        _
      $region30: #{tpu_custom_call.1} parent=5 // pred_check_branch
        %179 = sbr.rel (%p176) target = $region32
      $region31: #{tpu_custom_call.1} parent=5 // pred_region
        %s180 = ssub.s32 %s16, 1
        %s181 = sand.u32 %s29, 1
        %s182 = scalar_lea.sflag [#allocation3], %s181
        %s183 = sand.u32 %s29, 1
        %s184 = smul.addr %s183, 16
        %s185 = scalar_lea.vmem [#allocation2], %s184
        // Predicated region
        $region33: #{tpu_custom_call.1} parent=31 // pred_check
          %p186 = pneg %p42
        $region34: #{tpu_custom_call.1} parent=31 // pred_check_branch
          %188 = sbr.rel (%p186) target = $region36
        $region35: #{tpu_custom_call.1} parent=31 // pred_region
          %189 = dma.done %s182, 256
        $region36: #{tpu_custom_call.1} parent=31 // pred_fallthru
          _
        // Predicated region
        $region37: #{tpu_custom_call.1} parent=31 // pred_check
          %p190 = pneg %p63
        $region38: #{tpu_custom_call.1} parent=31 // pred_check_branch
          %192 = sbr.rel (%p190) target = $region40
        $region39: #{tpu_custom_call.1} parent=31 // pred_region
          %193 = dma.done [#allocation6], 2048
        $region40: #{tpu_custom_call.1} parent=31 // pred_fallthru
          _
        // Predicated region
        $region41: #{tpu_custom_call.1} parent=31 // pred_check
          %p194 = pneg %p84
        $region42: #{tpu_custom_call.1} parent=31 // pred_check_branch
          %196 = sbr.rel (%p194) target = $region44
        $region43: #{tpu_custom_call.1} parent=31 // pred_region
          %197 = dma.done [#allocation6], 64
        $region44: #{tpu_custom_call.1} parent=31 // pred_fallthru
          _
        %s198 = sand.u32 %s29, 1
        %s199 = scalar_lea.sflag [#allocation3], %s198
        %s200 = sand.u32 %s29, 1
        %s201 = smul.addr %s200, 16
        %s202 = scalar_lea.vmem [#allocation2], %s201
        %p203 = pneg %p42
        %p204 = pneg %p39
        %p205 = pneg %p63
        %p206 = pneg %p60
        %p207 = pneg %p84
        %p208 = pneg %p81
        %p209 = pneg %p110
        %p210 = pneg %p107
        %s211 = sand.u32 %s97, 1
        %s212 = scalar_lea.sflag [#allocation4], %s211
        %s213 = sand.u32 %s97, 1
        %s214 = smul.addr %s213, 64
        %s215 = scalar_lea.vmem [#allocation8], %s214
        %s216 = smul.u32 2, %s21
        %s217 = smul.u32 2, %s21
        %v218 = vld [vmem:[%s185] sm:$0xff]
        %v219 = vld [vmem:[%s185 + $0x8] sm:$0xff]
        %v220 = vld [vmem:[#allocation5] sm:$0xff]
        %v221 = vld [vmem:[#allocation5 + $0x8] sm:$0xff]
        %v222 = vld [vmem:[#allocation5 + $0x10] sm:$0xff]
        %v223 = vld [vmem:[#allocation5 + $0x18] sm:$0xff]
        %v224 = vld [vmem:[#allocation5 + $0x20] sm:$0xff]
        %v225 = vld [vmem:[#allocation5 + $0x28] sm:$0xff]
        %v226 = vld [vmem:[#allocation5 + $0x30] sm:$0xff]
        %v227 = vld [vmem:[#allocation5 + $0x38] sm:$0xff]
        %v228 = vld [vmem:[#allocation5 + $0x40] sm:$0xff]
        %v229 = vld [vmem:[#allocation5 + $0x48] sm:$0xff]
        %v230 = vld [vmem:[#allocation5 + $0x50] sm:$0xff]
        %v231 = vld [vmem:[#allocation5 + $0x58] sm:$0xff]
        %v232 = vld [vmem:[#allocation5 + $0x60] sm:$0xff]
        %v233 = vld [vmem:[#allocation5 + $0x68] sm:$0xff]
        %v234 = vld [vmem:[#allocation5 + $0x70] sm:$0xff]
        %v235 = vld [vmem:[#allocation5 + $0x78] sm:$0xff]
        %v236 = vld [vmem:[#allocation7] sm:$0xf]
        %v238 = vlaneseq
        %v239 = vshrl.u32 %v238, 7
        %v240 = vsub.s32 0, %v239
        %v241 = vrot.slane %v236, %v240
        %v242 = vlaneseq
        %v243 = vshrl.u32 %v242, 7
        %v244 = vsub.s32 1, %v243
        %v245 = vrot.slane %v236, %v244
        %v246 = vlaneseq
        %v247 = vshrl.u32 %v246, 7
        %v248 = vsub.s32 2, %v247
        %v249 = vrot.slane %v236, %v248
        %v250 = vlaneseq
        %v251 = vshrl.u32 %v250, 7
        %v252 = vsub.s32 3, %v251
        %v253 = vrot.slane %v236, %v252
        %vm258 = vcmask 261120
        %v260 = vsel %vm258, %v218, 0
        %v263 = vsel %vm258, %v219, 0
        %265 = vmatprep.subr.mxu0 0.0
        %266 = vmatpush1.msra.mxu0 0.0
        %267 = vmatprep.subr.mxu0 0.0
        %268 = vmatpush1.msra.mxu0 0.0
        %269 = vmatprep.subr.mxu0 0.0
        %270 = vmatpush1.msra.mxu0 0.0
        %271 = vmatprep.subr.mxu0 0.0
        %272 = vmatpush1.msra.mxu0 0.0
        %273 = vmatprep.subr.mxu0 0.0
        %274 = vmatpush1.msra.mxu0 0.0
        %275 = vmatprep.subr.mxu0 0.0
        %276 = vmatpush1.msra.mxu0 0.0
        %277 = vmatprep.subr.mxu0 0.0
        %278 = vmatpush1.msra.mxu0 0.0
        %279 = vmatprep.subr.mxu0 0.0
        %280 = vmatpush1.msra.mxu0 0.0
        %281 = vmatprep.subr.mxu0 0.0
        %282 = vmatpush1.msra.mxu0 0.0
        %283 = vmatprep.subr.mxu0 0.0
        %284 = vmatpush1.msra.mxu0 0.0
        %285 = vmatprep.subr.mxu0 0.0
        %286 = vmatpush1.msra.mxu0 0.0
        %287 = vmatprep.subr.mxu0 0.0
        %288 = vmatpush1.msra.mxu0 0.0
        %289 = vmatprep.subr.mxu0 %v233
        %290 = vmatpush1.msra.mxu0 %v232
        %291 = vmatprep.subr.mxu0 %v229
        %292 = vmatpush1.msra.mxu0 %v228
        %293 = vmatprep.subr.mxu0 %v225
        %294 = vmatpush1.msra.mxu0 %v224
        %295 = vmatprep.subr.mxu0 %v221
        %296 = vmatpush1.msra.mxu0 %v220
        %297 = vmatprep.subr.mxu0 0.0
        %298 = vmatpush2.msra.mxu0 0.0
        %299 = vmatprep.subr.mxu0 0.0
        %300 = vmatpush2.msra.mxu0 0.0
        %301 = vmatprep.subr.mxu0 0.0
        %302 = vmatpush2.msra.mxu0 0.0
        %303 = vmatprep.subr.mxu0 0.0
        %304 = vmatpush2.msra.mxu0 0.0
        %305 = vmatprep.subr.mxu0 0.0
        %306 = vmatpush2.msra.mxu0 0.0
        %307 = vmatprep.subr.mxu0 0.0
        %308 = vmatpush2.msra.mxu0 0.0
        %309 = vmatprep.subr.mxu0 0.0
        %310 = vmatpush2.msra.mxu0 0.0
        %311 = vmatprep.subr.mxu0 0.0
        %312 = vmatpush2.msra.mxu0 0.0
        %313 = vmatprep.subr.mxu0 0.0
        %314 = vmatpush2.msra.mxu0 0.0
        %315 = vmatprep.subr.mxu0 0.0
        %316 = vmatpush2.msra.mxu0 0.0
        %317 = vmatprep.subr.mxu0 0.0
        %318 = vmatpush2.msra.mxu0 0.0
        %319 = vmatprep.subr.mxu0 0.0
        %320 = vmatpush2.msra.mxu0 0.0
        %321 = vmatprep.subr.mxu0 0.0
        %322 = vmatpush2.msra.mxu0 0.0
        %323 = vmatprep.subr.mxu0 0.0
        %324 = vmatpush2.msra.mxu0 0.0
        %325 = vmatprep.subr.mxu0 0.0
        %326 = vmatpush2.msra.mxu0 0.0
        %327 = vmatprep.subr.mxu0 0.0
        %328 = vmatpush2.msra.mxu0 0.0
        %329 = vmatprep.mubr.f32.mxu0 0.0
        %330 = vmatmul.mubr.f32.gmra.mxu0 %v260
        %v331 = vpop.f32.mrf.mxu0
        %v332 = vadd.f32 %v241, %v331
        %v333 = vpop.f32.mrf.mxu0
        %v334 = vadd.f32 %v245, %v333
        %335 = vmatprep.mubr.f32.mxu0 0.0
        %336 = vmatmul.mubr.f32.gmra.mxu0 %v263
        %v337 = vpop.f32.mrf.mxu0
        %v338 = vadd.f32 %v241, %v337
        %v339 = vpop.f32.mrf.mxu0
        %v340 = vadd.f32 %v245, %v339
        %341 = vdwg.mxu0
        %342 = vmatprep.subr.mxu0 0.0
        %343 = vmatpush1.msra.mxu0 0.0
        %344 = vmatprep.subr.mxu0 0.0
        %345 = vmatpush1.msra.mxu0 0.0
        %346 = vmatprep.subr.mxu0 0.0
        %347 = vmatpush1.msra.mxu0 0.0
        %348 = vmatprep.subr.mxu0 0.0
        %349 = vmatpush1.msra.mxu0 0.0
        %350 = vmatprep.subr.mxu0 0.0
        %351 = vmatpush1.msra.mxu0 0.0
        %352 = vmatprep.subr.mxu0 0.0
        %353 = vmatpush1.msra.mxu0 0.0
        %354 = vmatprep.subr.mxu0 0.0
        %355 = vmatpush1.msra.mxu0 0.0
        %356 = vmatprep.subr.mxu0 0.0
        %357 = vmatpush1.msra.mxu0 0.0
        %358 = vmatprep.subr.mxu0 0.0
        %359 = vmatpush1.msra.mxu0 0.0
        %360 = vmatprep.subr.mxu0 0.0
        %361 = vmatpush1.msra.mxu0 0.0
        %362 = vmatprep.subr.mxu0 0.0
        %363 = vmatpush1.msra.mxu0 0.0
        %364 = vmatprep.subr.mxu0 0.0
        %365 = vmatpush1.msra.mxu0 0.0
        %366 = vmatprep.subr.mxu0 %v235
        %367 = vmatpush1.msra.mxu0 %v234
        %368 = vmatprep.subr.mxu0 %v231
        %369 = vmatpush1.msra.mxu0 %v230
        %370 = vmatprep.subr.mxu0 %v227
        %371 = vmatpush1.msra.mxu0 %v226
        %372 = vmatprep.subr.mxu0 %v223
        %373 = vmatpush1.msra.mxu0 %v222
        %374 = vmatprep.subr.mxu0 0.0
        %375 = vmatpush2.msra.mxu0 0.0
        %376 = vmatprep.subr.mxu0 0.0
        %377 = vmatpush2.msra.mxu0 0.0
        %378 = vmatprep.subr.mxu0 0.0
        %379 = vmatpush2.msra.mxu0 0.0
        %380 = vmatprep.subr.mxu0 0.0
        %381 = vmatpush2.msra.mxu0 0.0
        %382 = vmatprep.subr.mxu0 0.0
        %383 = vmatpush2.msra.mxu0 0.0
        %384 = vmatprep.subr.mxu0 0.0
        %385 = vmatpush2.msra.mxu0 0.0
        %386 = vmatprep.subr.mxu0 0.0
        %387 = vmatpush2.msra.mxu0 0.0
        %388 = vmatprep.subr.mxu0 0.0
        %389 = vmatpush2.msra.mxu0 0.0
        %390 = vmatprep.subr.mxu0 0.0
        %391 = vmatpush2.msra.mxu0 0.0
        %392 = vmatprep.subr.mxu0 0.0
        %393 = vmatpush2.msra.mxu0 0.0
        %394 = vmatprep.subr.mxu0 0.0
        %395 = vmatpush2.msra.mxu0 0.0
        %396 = vmatprep.subr.mxu0 0.0
        %397 = vmatpush2.msra.mxu0 0.0
        %398 = vmatprep.subr.mxu0 0.0
        %399 = vmatpush2.msra.mxu0 0.0
        %400 = vmatprep.subr.mxu0 0.0
        %401 = vmatpush2.msra.mxu0 0.0
        %402 = vmatprep.subr.mxu0 0.0
        %403 = vmatpush2.msra.mxu0 0.0
        %404 = vmatprep.subr.mxu0 0.0
        %405 = vmatpush2.msra.mxu0 0.0
        %406 = vmatprep.mubr.f32.mxu0 0.0
        %407 = vmatmul.mubr.f32.gmra.mxu0 %v260
        %v408 = vpop.f32.mrf.mxu0
        %v409 = vadd.f32 %v249, %v408
        %v410 = vpop.f32.mrf.mxu0
        %v411 = vadd.f32 %v253, %v410
        %412 = vmatprep.mubr.f32.mxu0 0.0
        %413 = vmatmul.mubr.f32.gmra.mxu0 %v263
        %v414 = vpop.f32.mrf.mxu0
        %v415 = vadd.f32 %v249, %v414
        %v416 = vpop.f32.mrf.mxu0
        %v417 = vadd.f32 %v253, %v416
        %418 = vdwg.mxu0
        %v419 = vmax.f32 %v332, %v409
        %v420 = vmax.f32 %v334, %v411
        %v421 = vmax.f32 %v419, %v420
        %422 = vmax.xlane.f32.xlu0 %v421
        %v423 = vpop.xlane.xlu0 %422
        %v424 = vmax.f32 %v338, %v415
        %v425 = vmax.f32 %v340, %v417
        %v426 = vmax.f32 %v424, %v425
        %427 = vmax.xlane.f32.xlu0 %v426
        %v428 = vpop.xlane.xlu0 %427
        %v429 = vsub.f32 %v332, %v423
        %v430 = vsub.f32 %v334, %v423
        %v431 = vsub.f32 %v409, %v423
        %v432 = vsub.f32 %v411, %v423
        %v433 = vsub.f32 %v338, %v428
        %v434 = vsub.f32 %v340, %v428
        %v435 = vsub.f32 %v415, %v428
        %v436 = vsub.f32 %v417, %v428
        %v437 = vmul.f32 %v429, 1.442695
        %v438 = vpow.pop %v437
        %v439 = vmul.f32 %v430, 1.442695
        %v440 = vpow.pop %v439
        %v441 = vmul.f32 %v431, 1.442695
        %v442 = vpow.pop %v441
        %v443 = vmul.f32 %v432, 1.442695
        %v444 = vpow.pop %v443
        %v445 = vmul.f32 %v433, 1.442695
        %v446 = vpow.pop %v445
        %v447 = vmul.f32 %v434, 1.442695
        %v448 = vpow.pop %v447
        %v449 = vmul.f32 %v435, 1.442695
        %v450 = vpow.pop %v449
        %v451 = vmul.f32 %v436, 1.442695
        %v452 = vpow.pop %v451
        %v453 = vadd.f32 %v438, %v440
        %v454 = vadd.f32 %v453, %v442
        %v455 = vadd.f32 %v454, %v444
        %456 = vadd.xlane.f32.xlu0 %v455
        %v457 = vpop.xlane.xlu0 %456
        %v458 = vadd.f32 %v446, %v448
        %v459 = vadd.f32 %v458, %v450
        %v460 = vadd.f32 %v459, %v452
        %461 = vadd.xlane.f32.xlu0 %v460
        %v462 = vpop.xlane.xlu0 %461
        %v463 = vlog2.pop %v457
        %v464 = vmul.f32 %v463, 0.6931472
        %v465 = vlog2.pop %v462
        %v466 = vmul.f32 %v465, 0.6931472
        %v467 = vadd.f32 %v423, %v464
        %v468 = vadd.f32 %v428, %v466
        %v469 = vsub.f32 %v332, %v467
        %v470 = vsub.f32 %v334, %v467
        %v471 = vsub.f32 %v409, %v467
        %v472 = vsub.f32 %v411, %v467
        %v473 = vsub.f32 %v338, %v468
        %v474 = vsub.f32 %v340, %v468
        %v475 = vsub.f32 %v415, %v468
        %v476 = vsub.f32 %v417, %v468
        %477 = vst [vmem:[%s215] sm:$0xff] %v469
        %478 = vst [vmem:[%s215 + $0x8] sm:$0xff] %v470
        %479 = vst [vmem:[%s215 + $0x10] sm:$0xff] %v471
        %480 = vst [vmem:[%s215 + $0x18] sm:$0xff] %v472
        %481 = vst [vmem:[%s215 + $0x20] sm:$0xff] %v473
        %482 = vst [vmem:[%s215 + $0x28] sm:$0xff] %v474
        %483 = vst [vmem:[%s215 + $0x30] sm:$0xff] %v475
        %484 = vst [vmem:[%s215 + $0x38] sm:$0xff] %v476
        %s485 = sand.u32 %s97, 1
        %s486 = scalar_lea.sflag [#allocation4], %s485
        %s487 = sand.u32 %s97, 1
        %s488 = smul.addr %s487, 64
        %s489 = scalar_lea.vmem [#allocation8], %s488
        // Predicated region
        $region45: #{tpu_custom_call.1} parent=31 // pred_check
          %p490 = pneg %p107
        $region46: #{tpu_custom_call.1} parent=31 // pred_check_branch
          %492 = sbr.rel (%p490) target = $region48
        $region47: #{tpu_custom_call.1} parent=31 // pred_region
          %s493 = smul.u32 2, %s21
          %s495 = ssub.s32 1024, 1024
          %496 = vsyncadd %s486, %s495
          %s497 = smul.addr %s493, 4
          %s498 = smul.addr %s497, 128
          %s499 = scalar_lea.hbm %s3, %s498
          %s500 = sshll.u32 %s489, 4
          %s501 = int_to_ptr.vmem [resolvable:$true] %s500
          %506 = dma.vmem_to_hbm [thread:$0]  %s501, 1024, %s499, %s486, 512, 512, 32
        $region48: #{tpu_custom_call.1} parent=31 // pred_fallthru
          _
      $region32: #{tpu_custom_call.1} parent=5 // pred_fallthru
        _
      %p507 = scmp.le.s32.totalorder 2, %s16
      // Predicated region
      $region49: #{tpu_custom_call.1} parent=5 // pred_check
        %p508 = pneg %p507
      $region50: #{tpu_custom_call.1} parent=5 // pred_check_branch
        %510 = sbr.rel (%p508) target = $region52
      $region51: #{tpu_custom_call.1} parent=5 // pred_region
        %s511 = ssub.s32 %s16, 2
        // Predicated region
        $region53: #{tpu_custom_call.1} parent=51 // pred_check
          %p512 = pneg %p113
        $region54: #{tpu_custom_call.1} parent=51 // pred_check_branch
          %514 = sbr.rel (%p512) target = $region56
        $region55: #{tpu_custom_call.1} parent=51 // pred_region
          %s515 = sand.u32 %s98, 1
          %s516 = scalar_lea.sflag [#allocation4], %s515
          %s517 = sand.u32 %s98, 1
          %s518 = smul.addr %s517, 64
          %s519 = scalar_lea.vmem [#allocation8], %s518
          %520 = dma.done %s516, 1024
        $region56: #{tpu_custom_call.1} parent=51 // pred_fallthru
          _
      $region52: #{tpu_custom_call.1} parent=5 // pred_fallthru
        _
    $region6: #{tpu_custom_call.1} parent=1 // loop_footer
      %s20 = sadd.s32 1, %s16
    $region7: #{tpu_custom_call.1} parent=1 // loop_footer_branch
      %15 = sbr.rel target = $region3
    $region8: #{tpu_custom_call.1} parent=1 // loop_exit
      _
    %521 = vsyncpa [#allocation3], 1
    %s522 = scalar_lea.sflag [#allocation3], 1
    %523 = vsyncpa %s522, 1
    %524 = vsyncpa [#allocation6], 1
    %525 = vsyncpa [#allocation4], 1
    %s526 = scalar_lea.sflag [#allocation4], 1
    %527 = vsyncpa %s526, 1

</llo_original>
